<compile_context>
chip_gen: v5e
topology: v5e:2x2
jax: 0.10.0
libtpu: 0.0.40
codegen_flags: <defaults>
</compile_context>

<pallas_src>
import functools

import jax
import jax.numpy as jnp
from jax.experimental import pallas as pl
from jax.experimental.pallas import tpu as pltpu

BN_EPS = 1e-5


def _round_up(v, m):
    return (v + m - 1) // m * m


def _mish_kernel(y):
    # mish(y) = y * tanh(softplus(y)) = y * (z^2 - 1) / (z^2 + 1), z = 1 + exp(y)
    # Clamp before exp so the unselected branch of the where never produces inf/NaN;
    # for y > 20, tanh(softplus(y)) == 1 to f32 precision, so mish(y) == y.
    y_c = jnp.minimum(y, 20.0)
    z = 1.0 + jnp.exp(y_c)
    z2 = z * z
    t = (z2 - 1.0) * pl.reciprocal(z2 + 1.0, approx=True)
    return jnp.where(y > 20.0, y, y * t)


def csp_resnet_kernel(x_ref,
                      wa_ref, ta_ref,   # part_1:   CBM(c, c, 1)
                      wb_ref, tb_ref,   # conv1:    CBM(c, c, 1)
                      wc_ref, tc_ref,   # conv2[0]: CBM(c, c/2, 1)
                      wd_ref, td_ref,   # conv2[1]: CBM(c/2, c, 1)
                      we_ref, te_ref,   # conv3:    CBM(c, c, 1)
                      out_ref):
    # x block: (1, C_pad, TL) -> (C_pad, TL); spatial axis on the lanes.
    x_b = x_ref[0].astype(jnp.bfloat16)

    def cbm(v_bf16, w_ref, t_ref):
        # bf16 x bf16 -> f32 accumulate on the MXU; BN scale already folded into w.
        y = jnp.dot(w_ref[...], v_bf16, preferred_element_type=jnp.float32)
        y = y + t_ref[...]          # (Cout_pad, 1) shift broadcast over lanes
        return _mish_kernel(y)      # f32

    p_1 = cbm(x_b, wa_ref, ta_ref)                            # part_1(x)
    p_2 = cbm(x_b, wb_ref, tb_ref)                            # conv1(x)
    h = cbm(p_2.astype(jnp.bfloat16), wc_ref, tc_ref)         # conv2[0](p_2)
    p_2_res = cbm(h.astype(jnp.bfloat16), wd_ref, td_ref)     # conv2[1](h)
    p_2 = p_2 + p_2_res                                       # residual add (f32)
    p_2 = cbm(p_2.astype(jnp.bfloat16), we_ref, te_ref)       # conv3(p_2)

    out_ref[0] = (p_1 + p_2).astype(out_ref.dtype)


def _fold_cbm(conv_w, conv_b, gamma, beta, run_mean, run_var, cout_pad, cin_pad):
    """Fold conv bias + inference BatchNorm into a single (weight, shift) pair.

    conv_w: (Cout, Cin) from a (Cout, Cin, 1, 1) 1x1 conv.
    Returns w' (cout_pad, cin_pad) bf16 and shift (cout_pad, 1) f32 such that
      CBM-pre-activation(x) = w' @ x + shift   for channels-first x (Cin, L).
    """
    inv_std = gamma / jnp.sqrt(run_var + BN_EPS)        # (Cout,)
    w = conv_w * inv_std[:, None]                       # BN scale folded into weights
    shift = (conv_b - run_mean) * inv_std + beta        # (Cout,)
    cout, cin = conv_w.shape
    w = jnp.pad(w, ((0, cout_pad - cout), (0, cin_pad - cin)))
    shift = jnp.pad(shift, (0, cout_pad - cout))
    return w.astype(jnp.bfloat16), shift[:, None].astype(jnp.float32)


def make_csp_resnet_params(c, key):
    """Deterministic synthetic, BN-folded, channel-padded params for CSPResNet(c)."""
    c_half = max(c // 2, 1)
    c_pad = _round_up(c, 8)
    c_half_pad = _round_up(c_half, 8)
    layer_dims = [
        (c, c, c_pad, c_pad),               # part_1
        (c, c, c_pad, c_pad),               # conv1
        (c, c_half, c_pad, c_half_pad),     # conv2[0]
        (c_half, c, c_half_pad, c_pad),     # conv2[1]
        (c, c, c_pad, c_pad),               # conv3
    ]
    params = []
    for i, (cin, cout, cin_pad, cout_pad) in enumerate(layer_dims):
        kw, kb = jax.random.split(jax.random.fold_in(key, i))
        bound = 1.0 / jnp.sqrt(cin)  # PyTorch Conv2d default init range
        conv_w = jax.random.uniform(kw, (cout, cin), jnp.float32, -bound, bound)
        conv_b = jax.random.uniform(kb, (cout,), jnp.float32, -bound, bound)
        gamma = jnp.ones((cout,), jnp.float32)
        beta = jnp.zeros((cout,), jnp.float32)
        run_mean = jnp.zeros((cout,), jnp.float32)
        run_var = jnp.ones((cout,), jnp.float32)
        params.extend(
            _fold_cbm(conv_w, conv_b, gamma, beta, run_mean, run_var,
                      cout_pad, cin_pad))
    return params  # 10 arrays: (w', shift) x 5


@functools.partial(jax.jit, static_argnames=("tl",))
def csp_resnet_forward(x_nchw, params, *, tl=512):
    N, C, H, W = x_nchw.shape
    L = H * W
    C_pad = params[0].shape[1]

    # Lane tile: multiple of 128, no larger than the padded spatial extent.
    tl = max(128, min(tl, _round_up(L, 128)))
    L_pad = _round_up(L, tl)

    # NCHW -> (N, C_pad, L_pad) without any layout transpose (reshape + zero pad only).
    x = x_nchw.reshape(N, C, L)
    if C_pad != C or L_pad != L:
        x = jnp.pad(x, ((0, 0), (0, C_pad - C), (0, L_pad - L)))

    grid = (N, L_pad // tl)
    x_spec = pl.BlockSpec((1, C_pad, tl), lambda n, i: (n, 0, i))
    param_specs = [pl.BlockSpec(p.shape, lambda n, i: (0, 0)) for p in params]

    # VMEM budget: 2x double-buffered input + 2x double-buffered output (f32 blocks)
    # + ~6 live f32 intermediates + resident weights; cap below v7x's 64 MiB physical.
    blk_f32 = C_pad * tl * 4
    w_bytes = sum(int(p.size) * p.dtype.itemsize for p in params)
    vmem_est = 10 * blk_f32 + 2 * w_bytes
    vmem_limit = int(min(48 * 2**20, max(24 * 2**20, 2 * vmem_est)))

    out = pl.pallas_call(
        csp_resnet_kernel,
        out_shape=jax.ShapeDtypeStruct((N, C_pad, L_pad), x_nchw.dtype),
        grid_spec=pltpu.PrefetchScalarGridSpec(
            num_scalar_prefetch=0,
            grid=grid,
            in_specs=[x_spec] + param_specs,
            out_specs=x_spec,
        ),
        compiler_params=pltpu.CompilerParams(
            dimension_semantics=("parallel", "parallel"),
            vmem_limit_bytes=vmem_limit),
    )(x, *params)

    # Drop channel / spatial padding and restore NCHW.
    return out[:, :C, :L].reshape(N, C, H, W)


def _reference_forward(x_nchw, params):
    """Pure-JAX reference mirroring the kernel numerics (bf16 MXU, f32 accumulate)."""
    N, C, H, W = x_nchw.shape
    (wa, ta, wb, tb, wc, tc, wd, td, we, te) = params
    C_pad = wa.shape[1]
    x = x_nchw.reshape(N, C, H * W).astype(jnp.float32)
    x = jnp.pad(x, ((0, 0), (0, C_pad - C), (0, 0)))

    def mish(y):
        return y * jnp.tanh(jax.nn.softplus(y))

    def cbm(v, w, t):
        y = jnp.einsum("oc,ncl->nol", w, v.astype(jnp.bfloat16),
                       preferred_element_type=jnp.float32)
        return mish(y + t[None])

    p1 = cbm(x, wa, ta)
    p2 = cbm(x, wb, tb)
    p2 = p2 + cbm(cbm(p2, wc, tc), wd, td)
    p2 = cbm(p2, we, te)
    out = (p1 + p2)[:, :C, :].astype(x_nchw.dtype)
    return out.reshape(N, C, H, W)


if __name__ == "__main__":
    key = jax.random.PRNGKey(0)
    k_x, k_p = jax.random.split(key)

    N, C, H, W = 2, 4, 16, 16
    x = jax.random.normal(k_x, (N, C, H, W), jnp.float32)
    params = make_csp_resnet_params(C, k_p)

    y = jax.block_until_ready(csp_resnet_forward(x, params))
    y_ref = _reference_forward(x, params)

    assert y.shape == (N, C, H, W)
    assert jnp.allclose(y, y_ref, atol=1e-2, rtol=1e-2), "mismatch vs reference"

    print("KERNEL_OK")
</pallas_src>

<mosaic_0001>
module attributes {stable_mosaic.version = 11 : i64} {
  func.func @csp_resnet_kernel(%arg0: i32, %arg1: i32, %arg2: memref<1x8x256xf32, #tpu.memory_space<vmem>>, %arg3: memref<8x8xbf16, #tpu.memory_space<vmem>>, %arg4: memref<8x1xf32, #tpu.memory_space<vmem>>, %arg5: memref<8x8xbf16, #tpu.memory_space<vmem>>, %arg6: memref<8x1xf32, #tpu.memory_space<vmem>>, %arg7: memref<8x8xbf16, #tpu.memory_space<vmem>>, %arg8: memref<8x1xf32, #tpu.memory_space<vmem>>, %arg9: memref<8x8xbf16, #tpu.memory_space<vmem>>, %arg10: memref<8x1xf32, #tpu.memory_space<vmem>>, %arg11: memref<8x8xbf16, #tpu.memory_space<vmem>>, %arg12: memref<8x1xf32, #tpu.memory_space<vmem>>, %arg13: memref<1x8x256xf32, #tpu.memory_space<vmem>>) attributes {dimension_semantics = [#tpu.dimension_semantics<parallel>, #tpu.dimension_semantics<parallel>], iteration_bounds = array<i64: 2, 1>, scalar_prefetch = 0 : i64, scratch_operands = 0 : i64, tpu.core_type = #tpu.core_type<tc>, window_params = [{transform_indices = @transform_0, window_bounds = array<i64: 1, 8, 256>}, {pipeline_mode = #tpu.pipeline_mode<synchronous>, transform_indices = @transform_1, window_bounds = array<i64: 8, 8>}, {pipeline_mode = #tpu.pipeline_mode<synchronous>, transform_indices = @transform_2, window_bounds = array<i64: 8, 1>}, {pipeline_mode = #tpu.pipeline_mode<synchronous>, transform_indices = @transform_3, window_bounds = array<i64: 8, 8>}, {pipeline_mode = #tpu.pipeline_mode<synchronous>, transform_indices = @transform_4, window_bounds = array<i64: 8, 1>}, {pipeline_mode = #tpu.pipeline_mode<synchronous>, transform_indices = @transform_5, window_bounds = array<i64: 8, 8>}, {pipeline_mode = #tpu.pipeline_mode<synchronous>, transform_indices = @transform_6, window_bounds = array<i64: 8, 1>}, {pipeline_mode = #tpu.pipeline_mode<synchronous>, transform_indices = @transform_7, window_bounds = array<i64: 8, 8>}, {pipeline_mode = #tpu.pipeline_mode<synchronous>, transform_indices = @transform_8, window_bounds = array<i64: 8, 1>}, {pipeline_mode = #tpu.pipeline_mode<synchronous>, transform_indices = @transform_9, window_bounds = array<i64: 8, 8>}, {pipeline_mode = #tpu.pipeline_mode<synchronous>, transform_indices = @transform_10, window_bounds = array<i64: 8, 1>}, {transform_indices = @transform_11, window_bounds = array<i64: 1, 8, 256>}]} {
    %c0 = arith.constant 0 : index
    %c0_0 = arith.constant 0 : index
    %c0_1 = arith.constant 0 : index
    %0 = vector.load %arg2[%c0, %c0_0, %c0_1] : memref<1x8x256xf32, #tpu.memory_space<vmem>>, vector<1x8x256xf32>
    %1 = vector.shape_cast %0 : vector<1x8x256xf32> to vector<8x256xf32>
    %2 = arith.truncf %1 : vector<8x256xf32> to vector<8x256xbf16>
    %c0_2 = arith.constant 0 : index
    %c0_3 = arith.constant 0 : index
    %3 = vector.load %arg3[%c0_2, %c0_3] : memref<8x8xbf16, #tpu.memory_space<vmem>>, vector<8x8xbf16>
    %cst = arith.constant dense<0.000000e+00> : vector<8x256xf32>
    %4 = tpu.matmul %3, %2, %cst {dimension_numbers = #tpu.dot_dimension_numbers<[1], [0], [0], [1], [0, 0, 1, 1], [], []>} : vector<8x8xbf16>, vector<8x256xbf16>, vector<8x256xf32> -> vector<8x256xf32>
    %c0_4 = arith.constant 0 : index
    %c0_5 = arith.constant 0 : index
    %5 = vector.load %arg4[%c0_4, %c0_5] : memref<8x1xf32, #tpu.memory_space<vmem>>, vector<8x1xf32>
    %6 = vector.broadcast %5 : vector<8x1xf32> to vector<8x256xf32>
    %7 = arith.addf %4, %6 : vector<8x256xf32>
    %cst_6 = arith.constant 2.000000e+01 : f32
    %8 = vector.broadcast %cst_6 : f32 to vector<8x256xf32>
    %9 = arith.minimumf %7, %8 : vector<8x256xf32>
    %10 = math.exp %9 : vector<8x256xf32>
    %cst_7 = arith.constant 1.000000e+00 : f32
    %11 = vector.broadcast %cst_7 : f32 to vector<8x256xf32>
    %12 = arith.addf %11, %10 : vector<8x256xf32>
    %13 = arith.mulf %12, %12 : vector<8x256xf32>
    %cst_8 = arith.constant 1.000000e+00 : f32
    %14 = vector.broadcast %cst_8 : f32 to vector<8x256xf32>
    %15 = arith.subf %13, %14 : vector<8x256xf32>
    %cst_9 = arith.constant 1.000000e+00 : f32
    %16 = vector.broadcast %cst_9 : f32 to vector<8x256xf32>
    %17 = arith.addf %13, %16 : vector<8x256xf32>
    %18 = tpu.reciprocal %17 {approx = true} : vector<8x256xf32> -> vector<8x256xf32>
    %19 = arith.mulf %15, %18 : vector<8x256xf32>
    %cst_10 = arith.constant 2.000000e+01 : f32
    %20 = vector.broadcast %cst_10 : f32 to vector<8x256xf32>
    %21 = arith.cmpf ogt, %7, %20 : vector<8x256xf32>
    %22 = arith.mulf %7, %19 : vector<8x256xf32>
    %23 = arith.select %21, %7, %22 : vector<8x256xi1>, vector<8x256xf32>
    %c0_11 = arith.constant 0 : index
    %c0_12 = arith.constant 0 : index
    %24 = vector.load %arg5[%c0_11, %c0_12] : memref<8x8xbf16, #tpu.memory_space<vmem>>, vector<8x8xbf16>
    %cst_13 = arith.constant dense<0.000000e+00> : vector<8x256xf32>
    %25 = tpu.matmul %24, %2, %cst_13 {dimension_numbers = #tpu.dot_dimension_numbers<[1], [0], [0], [1], [0, 0, 1, 1], [], []>} : vector<8x8xbf16>, vector<8x256xbf16>, vector<8x256xf32> -> vector<8x256xf32>
    %c0_14 = arith.constant 0 : index
    %c0_15 = arith.constant 0 : index
    %26 = vector.load %arg6[%c0_14, %c0_15] : memref<8x1xf32, #tpu.memory_space<vmem>>, vector<8x1xf32>
    %27 = vector.broadcast %26 : vector<8x1xf32> to vector<8x256xf32>
    %28 = arith.addf %25, %27 : vector<8x256xf32>
    %cst_16 = arith.constant 2.000000e+01 : f32
    %29 = vector.broadcast %cst_16 : f32 to vector<8x256xf32>
    %30 = arith.minimumf %28, %29 : vector<8x256xf32>
    %31 = math.exp %30 : vector<8x256xf32>
    %cst_17 = arith.constant 1.000000e+00 : f32
    %32 = vector.broadcast %cst_17 : f32 to vector<8x256xf32>
    %33 = arith.addf %32, %31 : vector<8x256xf32>
    %34 = arith.mulf %33, %33 : vector<8x256xf32>
    %cst_18 = arith.constant 1.000000e+00 : f32
    %35 = vector.broadcast %cst_18 : f32 to vector<8x256xf32>
    %36 = arith.subf %34, %35 : vector<8x256xf32>
    %cst_19 = arith.constant 1.000000e+00 : f32
    %37 = vector.broadcast %cst_19 : f32 to vector<8x256xf32>
    %38 = arith.addf %34, %37 : vector<8x256xf32>
    %39 = tpu.reciprocal %38 {approx = true} : vector<8x256xf32> -> vector<8x256xf32>
    %40 = arith.mulf %36, %39 : vector<8x256xf32>
    %cst_20 = arith.constant 2.000000e+01 : f32
    %41 = vector.broadcast %cst_20 : f32 to vector<8x256xf32>
    %42 = arith.cmpf ogt, %28, %41 : vector<8x256xf32>
    %43 = arith.mulf %28, %40 : vector<8x256xf32>
    %44 = arith.select %42, %28, %43 : vector<8x256xi1>, vector<8x256xf32>
    %45 = arith.truncf %44 : vector<8x256xf32> to vector<8x256xbf16>
    %c0_21 = arith.constant 0 : index
    %c0_22 = arith.constant 0 : index
    %46 = vector.load %arg7[%c0_21, %c0_22] : memref<8x8xbf16, #tpu.memory_space<vmem>>, vector<8x8xbf16>
    %cst_23 = arith.constant dense<0.000000e+00> : vector<8x256xf32>
    %47 = tpu.matmul %46, %45, %cst_23 {dimension_numbers = #tpu.dot_dimension_numbers<[1], [0], [0], [1], [0, 0, 1, 1], [], []>} : vector<8x8xbf16>, vector<8x256xbf16>, vector<8x256xf32> -> vector<8x256xf32>
    %c0_24 = arith.constant 0 : index
    %c0_25 = arith.constant 0 : index
    %48 = vector.load %arg8[%c0_24, %c0_25] : memref<8x1xf32, #tpu.memory_space<vmem>>, vector<8x1xf32>
    %49 = vector.broadcast %48 : vector<8x1xf32> to vector<8x256xf32>
    %50 = arith.addf %47, %49 : vector<8x256xf32>
    %cst_26 = arith.constant 2.000000e+01 : f32
    %51 = vector.broadcast %cst_26 : f32 to vector<8x256xf32>
    %52 = arith.minimumf %50, %51 : vector<8x256xf32>
    %53 = math.exp %52 : vector<8x256xf32>
    %cst_27 = arith.constant 1.000000e+00 : f32
    %54 = vector.broadcast %cst_27 : f32 to vector<8x256xf32>
    %55 = arith.addf %54, %53 : vector<8x256xf32>
    %56 = arith.mulf %55, %55 : vector<8x256xf32>
    %cst_28 = arith.constant 1.000000e+00 : f32
    %57 = vector.broadcast %cst_28 : f32 to vector<8x256xf32>
    %58 = arith.subf %56, %57 : vector<8x256xf32>
    %cst_29 = arith.constant 1.000000e+00 : f32
    %59 = vector.broadcast %cst_29 : f32 to vector<8x256xf32>
    %60 = arith.addf %56, %59 : vector<8x256xf32>
    %61 = tpu.reciprocal %60 {approx = true} : vector<8x256xf32> -> vector<8x256xf32>
    %62 = arith.mulf %58, %61 : vector<8x256xf32>
    %cst_30 = arith.constant 2.000000e+01 : f32
    %63 = vector.broadcast %cst_30 : f32 to vector<8x256xf32>
    %64 = arith.cmpf ogt, %50, %63 : vector<8x256xf32>
    %65 = arith.mulf %50, %62 : vector<8x256xf32>
    %66 = arith.select %64, %50, %65 : vector<8x256xi1>, vector<8x256xf32>
    %67 = arith.truncf %66 : vector<8x256xf32> to vector<8x256xbf16>
    %c0_31 = arith.constant 0 : index
    %c0_32 = arith.constant 0 : index
    %68 = vector.load %arg9[%c0_31, %c0_32] : memref<8x8xbf16, #tpu.memory_space<vmem>>, vector<8x8xbf16>
    %cst_33 = arith.constant dense<0.000000e+00> : vector<8x256xf32>
    %69 = tpu.matmul %68, %67, %cst_33 {dimension_numbers = #tpu.dot_dimension_numbers<[1], [0], [0], [1], [0, 0, 1, 1], [], []>} : vector<8x8xbf16>, vector<8x256xbf16>, vector<8x256xf32> -> vector<8x256xf32>
    %c0_34 = arith.constant 0 : index
    %c0_35 = arith.constant 0 : index
    %70 = vector.load %arg10[%c0_34, %c0_35] : memref<8x1xf32, #tpu.memory_space<vmem>>, vector<8x1xf32>
    %71 = vector.broadcast %70 : vector<8x1xf32> to vector<8x256xf32>
    %72 = arith.addf %69, %71 : vector<8x256xf32>
    %cst_36 = arith.constant 2.000000e+01 : f32
    %73 = vector.broadcast %cst_36 : f32 to vector<8x256xf32>
    %74 = arith.minimumf %72, %73 : vector<8x256xf32>
    %75 = math.exp %74 : vector<8x256xf32>
    %cst_37 = arith.constant 1.000000e+00 : f32
    %76 = vector.broadcast %cst_37 : f32 to vector<8x256xf32>
    %77 = arith.addf %76, %75 : vector<8x256xf32>
    %78 = arith.mulf %77, %77 : vector<8x256xf32>
    %cst_38 = arith.constant 1.000000e+00 : f32
    %79 = vector.broadcast %cst_38 : f32 to vector<8x256xf32>
    %80 = arith.subf %78, %79 : vector<8x256xf32>
    %cst_39 = arith.constant 1.000000e+00 : f32
    %81 = vector.broadcast %cst_39 : f32 to vector<8x256xf32>
    %82 = arith.addf %78, %81 : vector<8x256xf32>
    %83 = tpu.reciprocal %82 {approx = true} : vector<8x256xf32> -> vector<8x256xf32>
    %84 = arith.mulf %80, %83 : vector<8x256xf32>
    %cst_40 = arith.constant 2.000000e+01 : f32
    %85 = vector.broadcast %cst_40 : f32 to vector<8x256xf32>
    %86 = arith.cmpf ogt, %72, %85 : vector<8x256xf32>
    %87 = arith.mulf %72, %84 : vector<8x256xf32>
    %88 = arith.select %86, %72, %87 : vector<8x256xi1>, vector<8x256xf32>
    %89 = arith.addf %44, %88 : vector<8x256xf32>
    %90 = arith.truncf %89 : vector<8x256xf32> to vector<8x256xbf16>
    %c0_41 = arith.constant 0 : index
    %c0_42 = arith.constant 0 : index
    %91 = vector.load %arg11[%c0_41, %c0_42] : memref<8x8xbf16, #tpu.memory_space<vmem>>, vector<8x8xbf16>
    %cst_43 = arith.constant dense<0.000000e+00> : vector<8x256xf32>
    %92 = tpu.matmul %91, %90, %cst_43 {dimension_numbers = #tpu.dot_dimension_numbers<[1], [0], [0], [1], [0, 0, 1, 1], [], []>} : vector<8x8xbf16>, vector<8x256xbf16>, vector<8x256xf32> -> vector<8x256xf32>
    %c0_44 = arith.constant 0 : index
    %c0_45 = arith.constant 0 : index
    %93 = vector.load %arg12[%c0_44, %c0_45] : memref<8x1xf32, #tpu.memory_space<vmem>>, vector<8x1xf32>
    %94 = vector.broadcast %93 : vector<8x1xf32> to vector<8x256xf32>
    %95 = arith.addf %92, %94 : vector<8x256xf32>
    %cst_46 = arith.constant 2.000000e+01 : f32
    %96 = vector.broadcast %cst_46 : f32 to vector<8x256xf32>
    %97 = arith.minimumf %95, %96 : vector<8x256xf32>
    %98 = math.exp %97 : vector<8x256xf32>
    %cst_47 = arith.constant 1.000000e+00 : f32
    %99 = vector.broadcast %cst_47 : f32 to vector<8x256xf32>
    %100 = arith.addf %99, %98 : vector<8x256xf32>
    %101 = arith.mulf %100, %100 : vector<8x256xf32>
    %cst_48 = arith.constant 1.000000e+00 : f32
    %102 = vector.broadcast %cst_48 : f32 to vector<8x256xf32>
    %103 = arith.subf %101, %102 : vector<8x256xf32>
    %cst_49 = arith.constant 1.000000e+00 : f32
    %104 = vector.broadcast %cst_49 : f32 to vector<8x256xf32>
    %105 = arith.addf %101, %104 : vector<8x256xf32>
    %106 = tpu.reciprocal %105 {approx = true} : vector<8x256xf32> -> vector<8x256xf32>
    %107 = arith.mulf %103, %106 : vector<8x256xf32>
    %cst_50 = arith.constant 2.000000e+01 : f32
    %108 = vector.broadcast %cst_50 : f32 to vector<8x256xf32>
    %109 = arith.cmpf ogt, %95, %108 : vector<8x256xf32>
    %110 = arith.mulf %95, %107 : vector<8x256xf32>
    %111 = arith.select %109, %95, %110 : vector<8x256xi1>, vector<8x256xf32>
    %112 = arith.addf %23, %111 : vector<8x256xf32>
    %c0_51 = arith.constant 0 : index
    %c0_52 = arith.constant 0 : index
    %c0_53 = arith.constant 0 : index
    %113 = vector.load %arg13[%c0_51, %c0_52, %c0_53] : memref<1x8x256xf32, #tpu.memory_space<vmem>>, vector<1x8x256xf32>
    %114 = vector.shape_cast %113 : vector<1x8x256xf32> to vector<8x256xf32>
    %115 = vector.shape_cast %112 : vector<8x256xf32> to vector<1x8x256xf32>
    tpu.vector_store %arg13[%c0_51, %c0_52, %c0_53], %115 {strides = array<i32>} : memref<1x8x256xf32, #tpu.memory_space<vmem>>, vector<1x8x256xf32>,
    return
  }
  func.func @transform_0(%arg0: i32, %arg1: i32) -> (i32, i32, i32) {
    %c0_i32 = arith.constant 0 : i32
    %c0_i32_0 = arith.constant 0 : i32
    return %arg0, %c0_i32, %arg1 : i32, i32, i32
  }
  func.func @transform_1(%arg0: i32, %arg1: i32) -> (i32, i32) {
    %c0_i32 = arith.constant 0 : i32
    %c0_i32_0 = arith.constant 0 : i32
    %c0_i32_1 = arith.constant 0 : i32
    return %c0_i32, %c0_i32_0 : i32, i32
  }
  func.func @transform_2(%arg0: i32, %arg1: i32) -> (i32, i32) {
    %c0_i32 = arith.constant 0 : i32
    %c0_i32_0 = arith.constant 0 : i32
    %c0_i32_1 = arith.constant 0 : i32
    return %c0_i32, %c0_i32_0 : i32, i32
  }
  func.func @transform_3(%arg0: i32, %arg1: i32) -> (i32, i32) {
    %c0_i32 = arith.constant 0 : i32
    %c0_i32_0 = arith.constant 0 : i32
    %c0_i32_1 = arith.constant 0 : i32
    return %c0_i32, %c0_i32_0 : i32, i32
  }
  func.func @transform_4(%arg0: i32, %arg1: i32) -> (i32, i32) {
    %c0_i32 = arith.constant 0 : i32
    %c0_i32_0 = arith.constant 0 : i32
    %c0_i32_1 = arith.constant 0 : i32
    return %c0_i32, %c0_i32_0 : i32, i32
  }
  func.func @transform_5(%arg0: i32, %arg1: i32) -> (i32, i32) {
    %c0_i32 = arith.constant 0 : i32
    %c0_i32_0 = arith.constant 0 : i32
    %c0_i32_1 = arith.constant 0 : i32
    return %c0_i32, %c0_i32_0 : i32, i32
  }
  func.func @transform_6(%arg0: i32, %arg1: i32) -> (i32, i32) {
    %c0_i32 = arith.constant 0 : i32
    %c0_i32_0 = arith.constant 0 : i32
    %c0_i32_1 = arith.constant 0 : i32
    return %c0_i32, %c0_i32_0 : i32, i32
  }
  func.func @transform_7(%arg0: i32, %arg1: i32) -> (i32, i32) {
    %c0_i32 = arith.constant 0 : i32
    %c0_i32_0 = arith.constant 0 : i32
    %c0_i32_1 = arith.constant 0 : i32
    return %c0_i32, %c0_i32_0 : i32, i32
  }
  func.func @transform_8(%arg0: i32, %arg1: i32) -> (i32, i32) {
    %c0_i32 = arith.constant 0 : i32
    %c0_i32_0 = arith.constant 0 : i32
    %c0_i32_1 = arith.constant 0 : i32
    return %c0_i32, %c0_i32_0 : i32, i32
  }
  func.func @transform_9(%arg0: i32, %arg1: i32) -> (i32, i32) {
    %c0_i32 = arith.constant 0 : i32
    %c0_i32_0 = arith.constant 0 : i32
    %c0_i32_1 = arith.constant 0 : i32
    return %c0_i32, %c0_i32_0 : i32, i32
  }
  func.func @transform_10(%arg0: i32, %arg1: i32) -> (i32, i32) {
    %c0_i32 = arith.constant 0 : i32
    %c0_i32_0 = arith.constant 0 : i32
    %c0_i32_1 = arith.constant 0 : i32
    return %c0_i32, %c0_i32_0 : i32, i32
  }
  func.func @transform_11(%arg0: i32, %arg1: i32) -> (i32, i32, i32) {
    %c0_i32 = arith.constant 0 : i32
    %c0_i32_0 = arith.constant 0 : i32
    return %arg0, %c0_i32, %arg1 : i32, i32, i32
  }
}

</mosaic_0001>

<llo_original>
// kernel: csp_resnet_forward.1
$region0: #{csp_resnet_forward.1}
  #allocation0 [shape = 'u32[]', space=smem, size = 0x4, offset = 0x4, fixed_abs, tag = 'smem constant byte address 0x4 - core index']
  #allocation1 [shape = 'u32[72,128]{1,0:T(1,128)}', space=vmem, size = 0x9000, scoped, tag = 'internal scratch']
  %s0 = inlined_call_operand.vmem [shape: f32[2,8,256], index: 0, kind: input, shape index: {}]
  %s1 = inlined_call_operand.vmem [shape: bf16[8,8], index: 1, kind: input, shape index: {}]
  %s2 = inlined_call_operand.vmem [shape: f32[8,1], index: 2, kind: input, shape index: {}]
  %s3 = inlined_call_operand.vmem [shape: bf16[8,8], index: 3, kind: input, shape index: {}]
  %s4 = inlined_call_operand.vmem [shape: f32[8,1], index: 4, kind: input, shape index: {}]
  %s5 = inlined_call_operand.vmem [shape: bf16[8,8], index: 5, kind: input, shape index: {}]
  %s6 = inlined_call_operand.vmem [shape: f32[8,1], index: 6, kind: input, shape index: {}]
  %s7 = inlined_call_operand.vmem [shape: bf16[8,8], index: 7, kind: input, shape index: {}]
  %s8 = inlined_call_operand.vmem [shape: f32[8,1], index: 8, kind: input, shape index: {}]
  %s9 = inlined_call_operand.vmem [shape: bf16[8,8], index: 9, kind: input, shape index: {}]
  %s10 = inlined_call_operand.vmem [shape: f32[8,1], index: 10, kind: input, shape index: {}]
  %s11 = inlined_call_operand.vmem [shape: f32[2,8,256], index: 11, kind: output, shape index: {}]
  %s12 = sld [smem:[#allocation0]]
  $region77: #{csp_resnet_forward.1} parent=0
    _
  %s14 = ssub.s32 1, %s12
  %s15 = scalar_select 0, %s14, %s12
  loop: start=0, step=1, limit=4
  $region2: #{csp_resnet_forward.1} parent=0 // loop_pre_header
    _
  $region3: #{csp_resnet_forward.1} parent=0 // loop_header
    %s17 = sphi 0, %s21
    %p18 = scmp.ge.s32.totalorder %s17, 4
    %s24 = sphi 0, %s36
    %s25 = sphi 0, %s32
    %s26 = sphi 0, %s24
    %s27 = sphi 0, %s25
    %s28 = sphi 0, %s26
    %s29 = sphi 0, %s27
    %s41 = sphi 0, %s43
    %s44 = sphi 0, %s41
    %s45 = sphi 0, %s44
    %s61 = sphi 0, %s45
    %s65 = sphi 0, %s65
    %s67 = sphi 0, %s65
    %s68 = sphi 0, %s67
    %s82 = sphi 0, %s68
    %s86 = sphi 0, %s86
    %s88 = sphi 0, %s86
    %s89 = sphi 0, %s88
    %s103 = sphi 0, %s89
    %s107 = sphi 0, %s107
    %s109 = sphi 0, %s107
    %s110 = sphi 0, %s109
    %s124 = sphi 0, %s110
    %s128 = sphi 0, %s128
    %s130 = sphi 0, %s128
    %s131 = sphi 0, %s130
    %s145 = sphi 0, %s131
    %s149 = sphi 0, %s149
    %s151 = sphi 0, %s149
    %s152 = sphi 0, %s151
    %s166 = sphi 0, %s152
    %s170 = sphi 0, %s170
    %s172 = sphi 0, %s170
    %s173 = sphi 0, %s172
    %s187 = sphi 0, %s173
    %s191 = sphi 0, %s191
    %s193 = sphi 0, %s191
    %s194 = sphi 0, %s193
    %s208 = sphi 0, %s194
    %s212 = sphi 0, %s212
    %s214 = sphi 0, %s212
    %s215 = sphi 0, %s214
    %s229 = sphi 0, %s215
    %s233 = sphi 0, %s233
    %s235 = sphi 0, %s233
    %s236 = sphi 0, %s235
    %s250 = sphi 0, %s236
    %s254 = sphi 0, %s254
    %s256 = sphi 0, %s254
    %s257 = sphi 0, %s256
    %s271 = sphi 0, %s257
    %s279 = sphi 0, %s281
    %s282 = sphi 0, %s279
    %s283 = sphi 0, %s282
    %s299 = sphi 0, %s283
  $region4: #{csp_resnet_forward.1} parent=0 // loop_header_branch
    %20 = sbr.rel (%p18) target = $region8
  $region5: #{csp_resnet_forward.1} parent=0 // loop_body
    %s22 = ssub.s32 %s17, 1
    %s23 = ssub.s32 %s17, 2
    %s30 = sadd.s32 1, %s25
    %p31 = scmp.ge.s32.totalorder %s30, 1
    %s32 = scalar_select %p31, 0, %s30
    %s33 = sadd.s32 1, %s24
    %s34 = scalar_select %p31, %s33, %s24
    %p35 = scmp.ge.s32.totalorder %s34, 2
    %s36 = scalar_select %p35, 0, %s34
    %s37 = ssub.s32 %s24, %s36
    %s38 = ssub.s32 %s25, %s32
    %s39 = sor.u32 %s37, %s38
    %p40 = scmp.eq.s32.totalorder %s39, 0
    %s42 = sadd.s32 %s41, 1
    %s43 = scalar_select %p40, %s41, %s42
    %p46 = pneg %p40
    %p47 = scmp.eq.s32.totalorder %s17, 1
    %p48 = por %p46, %p47
    %p49 = scmp.ne.s32.totalorder %s41, %s44
    %p50 = scmp.eq.s32.totalorder %s17, 0
    %p51 = por %p49, %p50
    %p52 = scmp.ne.s32.totalorder %s41, %s44
    %p53 = scmp.eq.s32.totalorder %s22, 1
    %p54 = por %p52, %p53
    %p55 = scmp.ne.s32.totalorder %s44, %s45
    %p56 = scmp.eq.s32.totalorder %s22, 0
    %p57 = por %p55, %p56
    %p58 = scmp.ne.s32.totalorder %s44, %s45
    %p59 = scmp.eq.s32.totalorder %s23, 1
    %p60 = por %p58, %p59
    %p62 = scmp.ne.s32.totalorder %s45, %s61
    %p63 = scmp.eq.s32.totalorder %s23, 0
    %p64 = por %p62, %p63
    %s66 = sadd.s32 %s65, 1
    %p69 = scmp.eq.s32.totalorder %s17, 1
    %p70 = scmp.ne.s32.totalorder %s65, %s67
    %p71 = scmp.eq.s32.totalorder %s17, 0
    %p72 = por %p70, %p71
    %p73 = scmp.ne.s32.totalorder %s65, %s67
    %p74 = scmp.eq.s32.totalorder %s22, 1
    %p75 = por %p73, %p74
    %p76 = scmp.ne.s32.totalorder %s67, %s68
    %p77 = scmp.eq.s32.totalorder %s22, 0
    %p78 = por %p76, %p77
    %p79 = scmp.ne.s32.totalorder %s67, %s68
    %p80 = scmp.eq.s32.totalorder %s23, 1
    %p81 = por %p79, %p80
    %p83 = scmp.ne.s32.totalorder %s68, %s82
    %p84 = scmp.eq.s32.totalorder %s23, 0
    %p85 = por %p83, %p84
    %s87 = sadd.s32 %s86, 1
    %p90 = scmp.eq.s32.totalorder %s17, 1
    %p91 = scmp.ne.s32.totalorder %s86, %s88
    %p92 = scmp.eq.s32.totalorder %s17, 0
    %p93 = por %p91, %p92
    %p94 = scmp.ne.s32.totalorder %s86, %s88
    %p95 = scmp.eq.s32.totalorder %s22, 1
    %p96 = por %p94, %p95
    %p97 = scmp.ne.s32.totalorder %s88, %s89
    %p98 = scmp.eq.s32.totalorder %s22, 0
    %p99 = por %p97, %p98
    %p100 = scmp.ne.s32.totalorder %s88, %s89
    %p101 = scmp.eq.s32.totalorder %s23, 1
    %p102 = por %p100, %p101
    %p104 = scmp.ne.s32.totalorder %s89, %s103
    %p105 = scmp.eq.s32.totalorder %s23, 0
    %p106 = por %p104, %p105
    %s108 = sadd.s32 %s107, 1
    %p111 = scmp.eq.s32.totalorder %s17, 1
    %p112 = scmp.ne.s32.totalorder %s107, %s109
    %p113 = scmp.eq.s32.totalorder %s17, 0
    %p114 = por %p112, %p113
    %p115 = scmp.ne.s32.totalorder %s107, %s109
    %p116 = scmp.eq.s32.totalorder %s22, 1
    %p117 = por %p115, %p116
    %p118 = scmp.ne.s32.totalorder %s109, %s110
    %p119 = scmp.eq.s32.totalorder %s22, 0
    %p120 = por %p118, %p119
    %p121 = scmp.ne.s32.totalorder %s109, %s110
    %p122 = scmp.eq.s32.totalorder %s23, 1
    %p123 = por %p121, %p122
    %p125 = scmp.ne.s32.totalorder %s110, %s124
    %p126 = scmp.eq.s32.totalorder %s23, 0
    %p127 = por %p125, %p126
    %s129 = sadd.s32 %s128, 1
    %p132 = scmp.eq.s32.totalorder %s17, 1
    %p133 = scmp.ne.s32.totalorder %s128, %s130
    %p134 = scmp.eq.s32.totalorder %s17, 0
    %p135 = por %p133, %p134
    %p136 = scmp.ne.s32.totalorder %s128, %s130
    %p137 = scmp.eq.s32.totalorder %s22, 1
    %p138 = por %p136, %p137
    %p139 = scmp.ne.s32.totalorder %s130, %s131
    %p140 = scmp.eq.s32.totalorder %s22, 0
    %p141 = por %p139, %p140
    %p142 = scmp.ne.s32.totalorder %s130, %s131
    %p143 = scmp.eq.s32.totalorder %s23, 1
    %p144 = por %p142, %p143
    %p146 = scmp.ne.s32.totalorder %s131, %s145
    %p147 = scmp.eq.s32.totalorder %s23, 0
    %p148 = por %p146, %p147
    %s150 = sadd.s32 %s149, 1
    %p153 = scmp.eq.s32.totalorder %s17, 1
    %p154 = scmp.ne.s32.totalorder %s149, %s151
    %p155 = scmp.eq.s32.totalorder %s17, 0
    %p156 = por %p154, %p155
    %p157 = scmp.ne.s32.totalorder %s149, %s151
    %p158 = scmp.eq.s32.totalorder %s22, 1
    %p159 = por %p157, %p158
    %p160 = scmp.ne.s32.totalorder %s151, %s152
    %p161 = scmp.eq.s32.totalorder %s22, 0
    %p162 = por %p160, %p161
    %p163 = scmp.ne.s32.totalorder %s151, %s152
    %p164 = scmp.eq.s32.totalorder %s23, 1
    %p165 = por %p163, %p164
    %p167 = scmp.ne.s32.totalorder %s152, %s166
    %p168 = scmp.eq.s32.totalorder %s23, 0
    %p169 = por %p167, %p168
    %s171 = sadd.s32 %s170, 1
    %p174 = scmp.eq.s32.totalorder %s17, 1
    %p175 = scmp.ne.s32.totalorder %s170, %s172
    %p176 = scmp.eq.s32.totalorder %s17, 0
    %p177 = por %p175, %p176
    %p178 = scmp.ne.s32.totalorder %s170, %s172
    %p179 = scmp.eq.s32.totalorder %s22, 1
    %p180 = por %p178, %p179
    %p181 = scmp.ne.s32.totalorder %s172, %s173
    %p182 = scmp.eq.s32.totalorder %s22, 0
    %p183 = por %p181, %p182
    %p184 = scmp.ne.s32.totalorder %s172, %s173
    %p185 = scmp.eq.s32.totalorder %s23, 1
    %p186 = por %p184, %p185
    %p188 = scmp.ne.s32.totalorder %s173, %s187
    %p189 = scmp.eq.s32.totalorder %s23, 0
    %p190 = por %p188, %p189
    %s192 = sadd.s32 %s191, 1
    %p195 = scmp.eq.s32.totalorder %s17, 1
    %p196 = scmp.ne.s32.totalorder %s191, %s193
    %p197 = scmp.eq.s32.totalorder %s17, 0
    %p198 = por %p196, %p197
    %p199 = scmp.ne.s32.totalorder %s191, %s193
    %p200 = scmp.eq.s32.totalorder %s22, 1
    %p201 = por %p199, %p200
    %p202 = scmp.ne.s32.totalorder %s193, %s194
    %p203 = scmp.eq.s32.totalorder %s22, 0
    %p204 = por %p202, %p203
    %p205 = scmp.ne.s32.totalorder %s193, %s194
    %p206 = scmp.eq.s32.totalorder %s23, 1
    %p207 = por %p205, %p206
    %p209 = scmp.ne.s32.totalorder %s194, %s208
    %p210 = scmp.eq.s32.totalorder %s23, 0
    %p211 = por %p209, %p210
    %s213 = sadd.s32 %s212, 1
    %p216 = scmp.eq.s32.totalorder %s17, 1
    %p217 = scmp.ne.s32.totalorder %s212, %s214
    %p218 = scmp.eq.s32.totalorder %s17, 0
    %p219 = por %p217, %p218
    %p220 = scmp.ne.s32.totalorder %s212, %s214
    %p221 = scmp.eq.s32.totalorder %s22, 1
    %p222 = por %p220, %p221
    %p223 = scmp.ne.s32.totalorder %s214, %s215
    %p224 = scmp.eq.s32.totalorder %s22, 0
    %p225 = por %p223, %p224
    %p226 = scmp.ne.s32.totalorder %s214, %s215
    %p227 = scmp.eq.s32.totalorder %s23, 1
    %p228 = por %p226, %p227
    %p230 = scmp.ne.s32.totalorder %s215, %s229
    %p231 = scmp.eq.s32.totalorder %s23, 0
    %p232 = por %p230, %p231
    %s234 = sadd.s32 %s233, 1
    %p237 = scmp.eq.s32.totalorder %s17, 1
    %p238 = scmp.ne.s32.totalorder %s233, %s235
    %p239 = scmp.eq.s32.totalorder %s17, 0
    %p240 = por %p238, %p239
    %p241 = scmp.ne.s32.totalorder %s233, %s235
    %p242 = scmp.eq.s32.totalorder %s22, 1
    %p243 = por %p241, %p242
    %p244 = scmp.ne.s32.totalorder %s235, %s236
    %p245 = scmp.eq.s32.totalorder %s22, 0
    %p246 = por %p244, %p245
    %p247 = scmp.ne.s32.totalorder %s235, %s236
    %p248 = scmp.eq.s32.totalorder %s23, 1
    %p249 = por %p247, %p248
    %p251 = scmp.ne.s32.totalorder %s236, %s250
    %p252 = scmp.eq.s32.totalorder %s23, 0
    %p253 = por %p251, %p252
    %s255 = sadd.s32 %s254, 1
    %p258 = scmp.eq.s32.totalorder %s17, 1
    %p259 = scmp.ne.s32.totalorder %s254, %s256
    %p260 = scmp.eq.s32.totalorder %s17, 0
    %p261 = por %p259, %p260
    %p262 = scmp.ne.s32.totalorder %s254, %s256
    %p263 = scmp.eq.s32.totalorder %s22, 1
    %p264 = por %p262, %p263
    %p265 = scmp.ne.s32.totalorder %s256, %s257
    %p266 = scmp.eq.s32.totalorder %s22, 0
    %p267 = por %p265, %p266
    %p268 = scmp.ne.s32.totalorder %s256, %s257
    %p269 = scmp.eq.s32.totalorder %s23, 1
    %p270 = por %p268, %p269
    %p272 = scmp.ne.s32.totalorder %s257, %s271
    %p273 = scmp.eq.s32.totalorder %s23, 0
    %p274 = por %p272, %p273
    %s275 = ssub.s32 %s24, %s36
    %s276 = ssub.s32 %s25, %s32
    %s277 = sor.u32 %s275, %s276
    %p278 = scmp.eq.s32.totalorder %s277, 0
    %s280 = sadd.s32 %s279, 1
    %s281 = scalar_select %p278, %s279, %s280
    %p284 = pneg %p278
    %p285 = scmp.eq.s32.totalorder %s17, 1
    %p286 = por %p284, %p285
    %p287 = scmp.ne.s32.totalorder %s279, %s282
    %p288 = scmp.eq.s32.totalorder %s17, 0
    %p289 = por %p287, %p288
    %p290 = scmp.ne.s32.totalorder %s279, %s282
    %p291 = scmp.eq.s32.totalorder %s22, 1
    %p292 = por %p290, %p291
    %p293 = scmp.ne.s32.totalorder %s282, %s283
    %p294 = scmp.eq.s32.totalorder %s22, 0
    %p295 = por %p293, %p294
    %p296 = scmp.ne.s32.totalorder %s282, %s283
    %p297 = scmp.eq.s32.totalorder %s23, 1
    %p298 = por %p296, %p297
    %p300 = scmp.ne.s32.totalorder %s283, %s299
    %p301 = scmp.eq.s32.totalorder %s23, 0
    %p302 = por %p300, %p301
    %p303 = scmp.le.s32.totalorder 1, %s17
    %p304 = scmp.lt.s32.totalorder %s17, 3
    %p305 = pnand %p303, %p304
    %p306 = pneg %p305
    // Predicated region
    $region9: #{csp_resnet_forward.1} parent=5 // pred_check
      _
    $region10: #{csp_resnet_forward.1} parent=5 // pred_check_branch
      %308 = sbr.rel (%p305) target = $region12
    $region11: #{csp_resnet_forward.1} parent=5 // pred_region
      %s309 = ssub.s32 %s17, 1
      // Predicated region
      $region13: #{csp_resnet_forward.1} parent=11 // pred_check
        %p310 = pneg %p78
      $region14: #{csp_resnet_forward.1} parent=11 // pred_check_branch
        %312 = sbr.rel (%p310) target = $region16
      $region15: #{csp_resnet_forward.1} parent=11 // pred_region
        _
      $region16: #{csp_resnet_forward.1} parent=11 // pred_fallthru
        _
      // Predicated region
      $region17: #{csp_resnet_forward.1} parent=11 // pred_check
        %p313 = pneg %p99
      $region18: #{csp_resnet_forward.1} parent=11 // pred_check_branch
        %315 = sbr.rel (%p313) target = $region20
      $region19: #{csp_resnet_forward.1} parent=11 // pred_region
        _
      $region20: #{csp_resnet_forward.1} parent=11 // pred_fallthru
        _
      // Predicated region
      $region21: #{csp_resnet_forward.1} parent=11 // pred_check
        %p316 = pneg %p120
      $region22: #{csp_resnet_forward.1} parent=11 // pred_check_branch
        %318 = sbr.rel (%p316) target = $region24
      $region23: #{csp_resnet_forward.1} parent=11 // pred_region
        _
      $region24: #{csp_resnet_forward.1} parent=11 // pred_fallthru
        _
      // Predicated region
      $region25: #{csp_resnet_forward.1} parent=11 // pred_check
        %p319 = pneg %p141
      $region26: #{csp_resnet_forward.1} parent=11 // pred_check_branch
        %321 = sbr.rel (%p319) target = $region28
      $region27: #{csp_resnet_forward.1} parent=11 // pred_region
        _
      $region28: #{csp_resnet_forward.1} parent=11 // pred_fallthru
        _
      // Predicated region
      $region29: #{csp_resnet_forward.1} parent=11 // pred_check
        %p322 = pneg %p162
      $region30: #{csp_resnet_forward.1} parent=11 // pred_check_branch
        %324 = sbr.rel (%p322) target = $region32
      $region31: #{csp_resnet_forward.1} parent=11 // pred_region
        _
      $region32: #{csp_resnet_forward.1} parent=11 // pred_fallthru
        _
      // Predicated region
      $region33: #{csp_resnet_forward.1} parent=11 // pred_check
        %p325 = pneg %p183
      $region34: #{csp_resnet_forward.1} parent=11 // pred_check_branch
        %327 = sbr.rel (%p325) target = $region36
      $region35: #{csp_resnet_forward.1} parent=11 // pred_region
        _
      $region36: #{csp_resnet_forward.1} parent=11 // pred_fallthru
        _
      // Predicated region
      $region37: #{csp_resnet_forward.1} parent=11 // pred_check
        %p328 = pneg %p204
      $region38: #{csp_resnet_forward.1} parent=11 // pred_check_branch
        %330 = sbr.rel (%p328) target = $region40
      $region39: #{csp_resnet_forward.1} parent=11 // pred_region
        _
      $region40: #{csp_resnet_forward.1} parent=11 // pred_fallthru
        _
      // Predicated region
      $region41: #{csp_resnet_forward.1} parent=11 // pred_check
        %p331 = pneg %p225
      $region42: #{csp_resnet_forward.1} parent=11 // pred_check_branch
        %333 = sbr.rel (%p331) target = $region44
      $region43: #{csp_resnet_forward.1} parent=11 // pred_region
        _
      $region44: #{csp_resnet_forward.1} parent=11 // pred_fallthru
        _
      // Predicated region
      $region45: #{csp_resnet_forward.1} parent=11 // pred_check
        %p334 = pneg %p246
      $region46: #{csp_resnet_forward.1} parent=11 // pred_check_branch
        %336 = sbr.rel (%p334) target = $region48
      $region47: #{csp_resnet_forward.1} parent=11 // pred_region
        _
      $region48: #{csp_resnet_forward.1} parent=11 // pred_fallthru
        _
      // Predicated region
      $region49: #{csp_resnet_forward.1} parent=11 // pred_check
        %p337 = pneg %p267
      $region50: #{csp_resnet_forward.1} parent=11 // pred_check_branch
        %339 = sbr.rel (%p337) target = $region52
      $region51: #{csp_resnet_forward.1} parent=11 // pred_region
        _
      $region52: #{csp_resnet_forward.1} parent=11 // pred_fallthru
        _
    $region12: #{csp_resnet_forward.1} parent=5 // pred_fallthru
      _
    %p340 = scmp.lt.s32.totalorder %s17, 2
    // Predicated region
    $region53: #{csp_resnet_forward.1} parent=5 // pred_check
      %p341 = pneg %p340
    $region54: #{csp_resnet_forward.1} parent=5 // pred_check_branch
      %343 = sbr.rel (%p341) target = $region56
    $region55: #{csp_resnet_forward.1} parent=5 // pred_region
      // Predicated region
      $region57: #{csp_resnet_forward.1} parent=55 // pred_check
        %p344 = pneg %p51
      $region58: #{csp_resnet_forward.1} parent=55 // pred_check_branch
        %346 = sbr.rel (%p344) target = $region60
      $region59: #{csp_resnet_forward.1} parent=55 // pred_region
        %s347 = smul.u32 2, %s25
        %p348 = scmp.lt.s32.totalorder %s24, 1
        %s349 = scalar_select %p348, %s24, 1
        %p350 = scmp.lt.s32.totalorder %s347, 1
        %s351 = scalar_select %p350, %s347, 1
        %s352 = smul.addr %s349, 2
        %s353 = sadd.s32 %s351, %s352
        %s354 = smul.addr %s353, 8
        %s355 = scalar_lea.vmem %s0, %s354
        %s356 = smul.u32 2, %s25
      $region60: #{csp_resnet_forward.1} parent=55 // pred_fallthru
        _
    $region56: #{csp_resnet_forward.1} parent=5 // pred_fallthru
      _
    %p357 = scmp.le.s32.totalorder 1, %s17
    %p358 = scmp.lt.s32.totalorder %s17, 3
    %p359 = pnand %p357, %p358
    %p360 = pneg %p359
    // Predicated region
    $region61: #{csp_resnet_forward.1} parent=5 // pred_check
      _
    $region62: #{csp_resnet_forward.1} parent=5 // pred_check_branch
      %362 = sbr.rel (%p359) target = $region64
    $region63: #{csp_resnet_forward.1} parent=5 // pred_region
      %s363 = ssub.s32 %s17, 1
      %s364 = smul.u32 2, %s27
      %p365 = scmp.lt.s32.totalorder %s26, 1
      %s366 = scalar_select %p365, %s26, 1
      %p367 = scmp.lt.s32.totalorder %s364, 1
      %s368 = scalar_select %p367, %s364, 1
      %s369 = smul.addr %s366, 2
      %s370 = sadd.s32 %s368, %s369
      %s371 = smul.addr %s370, 8
      %s372 = scalar_lea.vmem %s0, %s371
      %p373 = pneg %p57
      %p374 = pneg %p54
      %p375 = pneg %p78
      %p376 = pneg %p75
      %p377 = pneg %p99
      %p378 = pneg %p96
      %p379 = pneg %p120
      %p380 = pneg %p117
      %p381 = pneg %p141
      %p382 = pneg %p138
      %p383 = pneg %p162
      %p384 = pneg %p159
      %p385 = pneg %p183
      %p386 = pneg %p180
      %p387 = pneg %p204
      %p388 = pneg %p201
      %p389 = pneg %p225
      %p390 = pneg %p222
      %p391 = pneg %p246
      %p392 = pneg %p243
      %p393 = pneg %p267
      %p394 = pneg %p264
      %p395 = pneg %p295
      %p396 = pneg %p292
      %s397 = smul.u32 2, %s27
      %p398 = scmp.lt.s32.totalorder %s26, 1
      %s399 = scalar_select %p398, %s26, 1
      %p400 = scmp.lt.s32.totalorder %s397, 1
      %s401 = scalar_select %p400, %s397, 1
      %s402 = smul.addr %s399, 2
      %s403 = sadd.s32 %s401, %s402
      %s404 = smul.addr %s403, 8
      %s405 = scalar_lea.vmem %s11, %s404
      %s406 = smul.u32 2, %s27
      %p407 = scmp.lt.s32.totalorder %s26, 1
      %s408 = scalar_select %p407, %s26, 1
      %p409 = scmp.lt.s32.totalorder %s406, 1
      %s410 = scalar_select %p409, %s406, 1
      %s411 = smul.addr %s408, 2
      %s412 = sadd.s32 %s410, %s411
      %s413 = smul.addr %s412, 8
      %s414 = scalar_lea.vmem %s0, %s413
      %s415 = smul.u32 2, %s27
      %s416 = smul.u32 2, %s27
      %p417 = scmp.lt.s32.totalorder %s26, 1
      %s418 = scalar_select %p417, %s26, 1
      %p419 = scmp.lt.s32.totalorder %s416, 1
      %s420 = scalar_select %p419, %s416, 1
      %s421 = smul.addr %s418, 2
      %s422 = sadd.s32 %s420, %s421
      %s423 = smul.addr %s422, 8
      %s424 = scalar_lea.vmem %s11, %s423
      %s425 = smul.u32 2, %s27
      %v427 = vld [vmem:[%s414] sm:$0xff]
      %v428 = vld [vmem:[%s414 + $0x8] sm:$0xff]
      %v429 = vpack.c.bf16 %v427, %v427
      %v430 = vpack.c.bf16 %v428, %v428
      %v431 = vld [vmem:[%s1] sm:$0xf]
      %v432 = vld [vmem:[%s2] sm:$0xff]
      %434 = vset.pattern.permute.xlu0 0
      %435 = vperm.xlu0 %434, %v432
      %v436 = vpop.permute.xlu0 %435
      %vm438 = vcmask 64512
      %v440 = vsel %vm438, %v431, 0
      %vm442 = vcmask 1043456
      %v444 = vsel %vm442, %v429, 0
      %v447 = vsel %vm442, %v430, 0
      %449 = vmatpush.bf16.msra.mxu0 0
      %450 = vmatpush.bf16.msra.mxu0 0
      %451 = vmatpush.bf16.msra.mxu0 0
      %452 = vmatpush.bf16.msra.mxu0 0
      %453 = vmatpush.bf16.msra.mxu0 0
      %454 = vmatpush.bf16.msra.mxu0 0
      %455 = vmatpush.bf16.msra.mxu0 0
      %456 = vmatpush.bf16.msra.mxu0 %v444
      %457 = vmatmul.bf16.gmra.mxu0 %v440
      %v458 = vpop.f32.mrf.mxu0
      %v459 = vadd.f32 %v436, %v458
      %v460 = vpop.f32.mrf.mxu0
      %461 = vdwg.mxu0
      %462 = vmatpush.bf16.msra.mxu0 0
      %463 = vmatpush.bf16.msra.mxu0 0
      %464 = vmatpush.bf16.msra.mxu0 0
      %465 = vmatpush.bf16.msra.mxu0 0
      %466 = vmatpush.bf16.msra.mxu0 0
      %467 = vmatpush.bf16.msra.mxu0 0
      %468 = vmatpush.bf16.msra.mxu0 0
      %469 = vmatpush.bf16.msra.mxu0 %v447
      %470 = vmatmul.bf16.gmra.mxu0 %v440
      %v471 = vpop.f32.mrf.mxu0
      %v472 = vadd.f32 %v436, %v471
      %v473 = vpop.f32.mrf.mxu0
      %474 = vdwg.mxu0
      %v475 = vmin.f32 %v459, 20.0
      %v476 = vmin.f32 %v472, 20.0
      %v477 = vmul.f32 %v475, 1.442695
      %v478 = vpow.pop %v477
      %v479 = vmul.f32 %v476, 1.442695
      %v480 = vpow.pop %v479
      %v481 = vadd.f32 %v478, 1.0
      %v482 = vadd.f32 %v480, 1.0
      %v483 = vmul.f32 %v481, %v481
      %v484 = vmul.f32 %v482, %v482
      %v485 = vsub.f32 %v483, 1.0
      %v486 = vsub.f32 %v484, 1.0
      %v487 = vadd.f32 %v483, 1.0
      %v488 = vadd.f32 %v484, 1.0
      %v489 = vrcp.pop %v487
      %v490 = vrcp.pop %v488
      %v491 = vmul.f32 %v485, %v489
      %v492 = vmul.f32 %v486, %v490
      %vm493 = vcmp.gt.f32.partialorder %v459, 20.0
      %vm494 = vcmp.gt.f32.partialorder %v472, 20.0
      %v495 = vmul.f32 %v459, %v491
      %v496 = vmul.f32 %v472, %v492
      %v497 = vsel %vm493, %v459, %v495
      %v498 = vsel %vm494, %v472, %v496
      %v499 = vld [vmem:[%s3] sm:$0xf]
      %v500 = vld [vmem:[%s4] sm:$0xff]
      %502 = vset.pattern.permute.xlu0 0
      %503 = vperm.xlu0 %502, %v500
      %v504 = vpop.permute.xlu0 %503
      %v507 = vsel %vm438, %v499, 0
      %509 = vmatpush.bf16.msra.mxu0 0
      %510 = vmatpush.bf16.msra.mxu0 0
      %511 = vmatpush.bf16.msra.mxu0 0
      %512 = vmatpush.bf16.msra.mxu0 0
      %513 = vmatpush.bf16.msra.mxu0 0
      %514 = vmatpush.bf16.msra.mxu0 0
      %515 = vmatpush.bf16.msra.mxu0 0
      %516 = vmatpush.bf16.msra.mxu0 %v444
      %517 = vmatmul.bf16.gmra.mxu0 %v507
      %v518 = vpop.f32.mrf.mxu0
      %v519 = vadd.f32 %v504, %v518
      %v520 = vpop.f32.mrf.mxu0
      %521 = vdwg.mxu0
      %522 = vmatpush.bf16.msra.mxu0 0
      %523 = vmatpush.bf16.msra.mxu0 0
      %524 = vmatpush.bf16.msra.mxu0 0
      %525 = vmatpush.bf16.msra.mxu0 0
      %526 = vmatpush.bf16.msra.mxu0 0
      %527 = vmatpush.bf16.msra.mxu0 0
      %528 = vmatpush.bf16.msra.mxu0 0
      %529 = vmatpush.bf16.msra.mxu0 %v447
      %530 = vmatmul.bf16.gmra.mxu0 %v507
      %v531 = vpop.f32.mrf.mxu0
      %v532 = vadd.f32 %v504, %v531
      %v533 = vpop.f32.mrf.mxu0
      %534 = vdwg.mxu0
      %v535 = vmin.f32 %v519, 20.0
      %v536 = vmin.f32 %v532, 20.0
      %v537 = vmul.f32 %v535, 1.442695
      %v538 = vpow.pop %v537
      %v539 = vmul.f32 %v536, 1.442695
      %v540 = vpow.pop %v539
      %v541 = vadd.f32 %v538, 1.0
      %v542 = vadd.f32 %v540, 1.0
      %v543 = vmul.f32 %v541, %v541
      %v544 = vmul.f32 %v542, %v542
      %v545 = vsub.f32 %v543, 1.0
      %v546 = vsub.f32 %v544, 1.0
      %v547 = vadd.f32 %v543, 1.0
      %v548 = vadd.f32 %v544, 1.0
      %v549 = vrcp.pop %v547
      %v550 = vrcp.pop %v548
      %v551 = vmul.f32 %v545, %v549
      %v552 = vmul.f32 %v546, %v550
      %vm553 = vcmp.gt.f32.partialorder %v519, 20.0
      %vm554 = vcmp.gt.f32.partialorder %v532, 20.0
      %v555 = vmul.f32 %v519, %v551
      %v556 = vmul.f32 %v532, %v552
      %v557 = vsel %vm553, %v519, %v555
      %v558 = vsel %vm554, %v532, %v556
      %v559 = vpack.c.bf16 %v557, %v557
      %v560 = vpack.c.bf16 %v558, %v558
      %v561 = vld [vmem:[%s5] sm:$0xf]
      %v562 = vld [vmem:[%s6] sm:$0xff]
      %564 = vset.pattern.permute.xlu0 0
      %565 = vperm.xlu0 %564, %v562
      %v566 = vpop.permute.xlu0 %565
      %v569 = vsel %vm438, %v561, 0
      %v572 = vsel %vm442, %v559, 0
      %v575 = vsel %vm442, %v560, 0
      %577 = vmatpush.bf16.msra.mxu0 0
      %578 = vmatpush.bf16.msra.mxu0 0
      %579 = vmatpush.bf16.msra.mxu0 0
      %580 = vmatpush.bf16.msra.mxu0 0
      %581 = vmatpush.bf16.msra.mxu0 0
      %582 = vmatpush.bf16.msra.mxu0 0
      %583 = vmatpush.bf16.msra.mxu0 0
      %584 = vmatpush.bf16.msra.mxu0 %v572
      %585 = vmatmul.bf16.gmra.mxu0 %v569
      %v586 = vpop.f32.mrf.mxu0
      %v587 = vadd.f32 %v566, %v586
      %v588 = vpop.f32.mrf.mxu0
      %589 = vdwg.mxu0
      %590 = vmatpush.bf16.msra.mxu0 0
      %591 = vmatpush.bf16.msra.mxu0 0
      %592 = vmatpush.bf16.msra.mxu0 0
      %593 = vmatpush.bf16.msra.mxu0 0
      %594 = vmatpush.bf16.msra.mxu0 0
      %595 = vmatpush.bf16.msra.mxu0 0
      %596 = vmatpush.bf16.msra.mxu0 0
      %597 = vmatpush.bf16.msra.mxu0 %v575
      %598 = vmatmul.bf16.gmra.mxu0 %v569
      %v599 = vpop.f32.mrf.mxu0
      %v600 = vadd.f32 %v566, %v599
      %v601 = vpop.f32.mrf.mxu0
      %602 = vdwg.mxu0
      %v603 = vmin.f32 %v587, 20.0
      %v604 = vmin.f32 %v600, 20.0
      %v605 = vmul.f32 %v603, 1.442695
      %v606 = vpow.pop %v605
      %v607 = vmul.f32 %v604, 1.442695
      %v608 = vpow.pop %v607
      %v609 = vadd.f32 %v606, 1.0
      %v610 = vadd.f32 %v608, 1.0
      %v611 = vmul.f32 %v609, %v609
      %v612 = vmul.f32 %v610, %v610
      %v613 = vsub.f32 %v611, 1.0
      %v614 = vsub.f32 %v612, 1.0
      %v615 = vadd.f32 %v611, 1.0
      %v616 = vadd.f32 %v612, 1.0
      %v617 = vrcp.pop %v615
      %v618 = vrcp.pop %v616
      %v619 = vmul.f32 %v613, %v617
      %v620 = vmul.f32 %v614, %v618
      %vm621 = vcmp.gt.f32.partialorder %v587, 20.0
      %vm622 = vcmp.gt.f32.partialorder %v600, 20.0
      %v623 = vmul.f32 %v587, %v619
      %v624 = vmul.f32 %v600, %v620
      %v625 = vsel %vm621, %v587, %v623
      %v626 = vsel %vm622, %v600, %v624
      %v627 = vpack.c.bf16 %v625, %v625
      %v628 = vpack.c.bf16 %v626, %v626
      %v629 = vld [vmem:[%s7] sm:$0xf]
      %v630 = vld [vmem:[%s8] sm:$0xff]
      %632 = vset.pattern.permute.xlu0 0
      %633 = vperm.xlu0 %632, %v630
      %v634 = vpop.permute.xlu0 %633
      %v637 = vsel %vm438, %v629, 0
      %v640 = vsel %vm442, %v627, 0
      %v643 = vsel %vm442, %v628, 0
      %645 = vmatpush.bf16.msra.mxu0 0
      %646 = vmatpush.bf16.msra.mxu0 0
      %647 = vmatpush.bf16.msra.mxu0 0
      %648 = vmatpush.bf16.msra.mxu0 0
      %649 = vmatpush.bf16.msra.mxu0 0
      %650 = vmatpush.bf16.msra.mxu0 0
      %651 = vmatpush.bf16.msra.mxu0 0
      %652 = vmatpush.bf16.msra.mxu0 %v640
      %653 = vmatmul.bf16.gmra.mxu0 %v637
      %v654 = vpop.f32.mrf.mxu0
      %v655 = vadd.f32 %v634, %v654
      %v656 = vpop.f32.mrf.mxu0
      %657 = vdwg.mxu0
      %658 = vmatpush.bf16.msra.mxu0 0
      %659 = vmatpush.bf16.msra.mxu0 0
      %660 = vmatpush.bf16.msra.mxu0 0
      %661 = vmatpush.bf16.msra.mxu0 0
      %662 = vmatpush.bf16.msra.mxu0 0
      %663 = vmatpush.bf16.msra.mxu0 0
      %664 = vmatpush.bf16.msra.mxu0 0
      %665 = vmatpush.bf16.msra.mxu0 %v643
      %666 = vmatmul.bf16.gmra.mxu0 %v637
      %v667 = vpop.f32.mrf.mxu0
      %v668 = vadd.f32 %v634, %v667
      %v669 = vpop.f32.mrf.mxu0
      %670 = vdwg.mxu0
      %v671 = vmin.f32 %v655, 20.0
      %v672 = vmin.f32 %v668, 20.0
      %v673 = vmul.f32 %v671, 1.442695
      %v674 = vpow.pop %v673
      %v675 = vmul.f32 %v672, 1.442695
      %v676 = vpow.pop %v675
      %v677 = vadd.f32 %v674, 1.0
      %v678 = vadd.f32 %v676, 1.0
      %v679 = vmul.f32 %v677, %v677
      %v680 = vmul.f32 %v678, %v678
      %v681 = vsub.f32 %v679, 1.0
      %v682 = vsub.f32 %v680, 1.0
      %v683 = vadd.f32 %v679, 1.0
      %v684 = vadd.f32 %v680, 1.0
      %v685 = vrcp.pop %v683
      %v686 = vrcp.pop %v684
      %v687 = vmul.f32 %v681, %v685
      %v688 = vmul.f32 %v682, %v686
      %vm689 = vcmp.gt.f32.partialorder %v655, 20.0
      %vm690 = vcmp.gt.f32.partialorder %v668, 20.0
      %v691 = vmul.f32 %v655, %v687
      %v692 = vmul.f32 %v668, %v688
      %v693 = vsel %vm689, %v655, %v691
      %v694 = vsel %vm690, %v668, %v692
      %v695 = vadd.f32 %v557, %v693
      %v696 = vadd.f32 %v558, %v694
      %v697 = vpack.c.bf16 %v695, %v695
      %v698 = vpack.c.bf16 %v696, %v696
      %v699 = vld [vmem:[%s9] sm:$0xf]
      %v700 = vld [vmem:[%s10] sm:$0xff]
      %702 = vset.pattern.permute.xlu0 0
      %703 = vperm.xlu0 %702, %v700
      %v704 = vpop.permute.xlu0 %703
      %v707 = vsel %vm438, %v699, 0
      %v710 = vsel %vm442, %v697, 0
      %v713 = vsel %vm442, %v698, 0
      %715 = vmatpush.bf16.msra.mxu0 0
      %716 = vmatpush.bf16.msra.mxu0 0
      %717 = vmatpush.bf16.msra.mxu0 0
      %718 = vmatpush.bf16.msra.mxu0 0
      %719 = vmatpush.bf16.msra.mxu0 0
      %720 = vmatpush.bf16.msra.mxu0 0
      %721 = vmatpush.bf16.msra.mxu0 0
      %722 = vmatpush.bf16.msra.mxu0 %v710
      %723 = vmatmul.bf16.gmra.mxu0 %v707
      %v724 = vpop.f32.mrf.mxu0
      %v725 = vadd.f32 %v704, %v724
      %v726 = vpop.f32.mrf.mxu0
      %727 = vdwg.mxu0
      %728 = vmatpush.bf16.msra.mxu0 0
      %729 = vmatpush.bf16.msra.mxu0 0
      %730 = vmatpush.bf16.msra.mxu0 0
      %731 = vmatpush.bf16.msra.mxu0 0
      %732 = vmatpush.bf16.msra.mxu0 0
      %733 = vmatpush.bf16.msra.mxu0 0
      %734 = vmatpush.bf16.msra.mxu0 0
      %735 = vmatpush.bf16.msra.mxu0 %v713
      %736 = vmatmul.bf16.gmra.mxu0 %v707
      %v737 = vpop.f32.mrf.mxu0
      %v738 = vadd.f32 %v704, %v737
      %v739 = vpop.f32.mrf.mxu0
      %740 = vdwg.mxu0
      %v741 = vmin.f32 %v725, 20.0
      %v742 = vmin.f32 %v738, 20.0
      %v743 = vmul.f32 %v741, 1.442695
      %v744 = vpow.pop %v743
      %v745 = vmul.f32 %v742, 1.442695
      %v746 = vpow.pop %v745
      %v747 = vadd.f32 %v744, 1.0
      %v748 = vadd.f32 %v746, 1.0
      %v749 = vmul.f32 %v747, %v747
      %v750 = vmul.f32 %v748, %v748
      %v751 = vsub.f32 %v749, 1.0
      %v752 = vsub.f32 %v750, 1.0
      %v753 = vadd.f32 %v749, 1.0
      %v754 = vadd.f32 %v750, 1.0
      %v755 = vrcp.pop %v753
      %v756 = vrcp.pop %v754
      %v757 = vmul.f32 %v751, %v755
      %v758 = vmul.f32 %v752, %v756
      %vm759 = vcmp.gt.f32.partialorder %v725, 20.0
      %vm760 = vcmp.gt.f32.partialorder %v738, 20.0
      %v761 = vmul.f32 %v725, %v757
      %v762 = vmul.f32 %v738, %v758
      %v763 = vsel %vm759, %v725, %v761
      %v764 = vsel %vm760, %v738, %v762
      %v765 = vadd.f32 %v497, %v763
      %v766 = vadd.f32 %v498, %v764
      %767 = vst [vmem:[%s424] sm:$0xff] %v765
      %768 = vst [vmem:[%s424 + $0x8] sm:$0xff] %v766
      %s769 = smul.u32 2, %s27
      %p770 = scmp.lt.s32.totalorder %s26, 1
      %s771 = scalar_select %p770, %s26, 1
      %p772 = scmp.lt.s32.totalorder %s769, 1
      %s773 = scalar_select %p772, %s769, 1
      %s774 = smul.addr %s771, 2
      %s775 = sadd.s32 %s773, %s774
      %s776 = smul.addr %s775, 8
      %s777 = scalar_lea.vmem %s11, %s776
      // Predicated region
      $region65: #{csp_resnet_forward.1} parent=63 // pred_check
        %p778 = pneg %p292
      $region66: #{csp_resnet_forward.1} parent=63 // pred_check_branch
        %780 = sbr.rel (%p778) target = $region68
      $region67: #{csp_resnet_forward.1} parent=63 // pred_region
        %s781 = smul.u32 2, %s27
      $region68: #{csp_resnet_forward.1} parent=63 // pred_fallthru
        _
    $region64: #{csp_resnet_forward.1} parent=5 // pred_fallthru
      _
    %p782 = scmp.le.s32.totalorder 2, %s17
    // Predicated region
    $region69: #{csp_resnet_forward.1} parent=5 // pred_check
      %p783 = pneg %p782
    $region70: #{csp_resnet_forward.1} parent=5 // pred_check_branch
      %785 = sbr.rel (%p783) target = $region72
    $region71: #{csp_resnet_forward.1} parent=5 // pred_region
      %s786 = ssub.s32 %s17, 2
      // Predicated region
      $region73: #{csp_resnet_forward.1} parent=71 // pred_check
        %p787 = pneg %p298
      $region74: #{csp_resnet_forward.1} parent=71 // pred_check_branch
        %789 = sbr.rel (%p787) target = $region76
      $region75: #{csp_resnet_forward.1} parent=71 // pred_region
        %s790 = smul.u32 2, %s29
        %p791 = scmp.lt.s32.totalorder %s28, 1
        %s792 = scalar_select %p791, %s28, 1
        %p793 = scmp.lt.s32.totalorder %s790, 1
        %s794 = scalar_select %p793, %s790, 1
        %s795 = smul.addr %s792, 2
        %s796 = sadd.s32 %s794, %s795
        %s797 = smul.addr %s796, 8
        %s798 = scalar_lea.vmem %s11, %s797
      $region76: #{csp_resnet_forward.1} parent=71 // pred_fallthru
        _
    $region72: #{csp_resnet_forward.1} parent=5 // pred_fallthru
      _
  $region6: #{csp_resnet_forward.1} parent=0 // loop_footer
    %s21 = sadd.s32 1, %s17
  $region7: #{csp_resnet_forward.1} parent=0 // loop_footer_branch
    %16 = sbr.rel target = $region3
  $region8: #{csp_resnet_forward.1} parent=0 // loop_exit
    _

</llo_original>
